<compile_context>
chip_gen: v6e
topology: v6e:2x2x1
jax: 0.10.0
libtpu: 0.0.40
codegen_flags: <defaults>
</compile_context>

<pallas_src>
import functools

import jax
import jax.numpy as jnp
from jax.experimental import pallas as pl
from jax.experimental.pallas import tpu as pltpu

IN_FEATURES = 785
HIDDEN = 256


def _round_up(n, m):
    return (n + m - 1) // m * m


def _disc_kernel(x_ref, w1_ref, b1_ref, w2_ref, b2_ref, w3_ref, b3_ref, o_ref):
    # x tile: (tile_b, 785) -> bf16 MXU operand (no-op if x arrives as bf16).
    x = x_ref[...].astype(jnp.bfloat16)

    # Layer 1: (tile_b, 785) @ (785, 256), f32 accumulate.
    h1 = jnp.dot(x, w1_ref[...], preferred_element_type=jnp.float32) + b1_ref[...]
    h1 = jnp.maximum(h1, 0.2 * h1)                       # LeakyReLU(0.2), f32

    # Layer 2: (tile_b, 256) @ (256, 256), f32 accumulate.
    h2 = jnp.dot(h1.astype(jnp.bfloat16), w2_ref[...],
                 preferred_element_type=jnp.float32) + b2_ref[...]
    h2 = jnp.maximum(h2, 0.2 * h2)                       # LeakyReLU(0.2), f32

    # Layer 3 (256 -> 1): contract the bf16 w3 row (1, 256) against h2's
    # feature axis -> (1, tile_b).  Batch lands on the LANE axis so the store
    # is lane-dense (unmasked vst); bf16 operands keep it single-pass on the
    # bf16-native MXUs.
    h3 = jax.lax.dot_general(w3_ref[...], h2.astype(jnp.bfloat16),
                             (((1,), (1,)), ((), ())),
                             preferred_element_type=jnp.float32)
    h3 = h3 + b3_ref[...]                                # (1, tile_b) + (1, 1)

    # Sigmoid: exp on the EUP, divide via approx reciprocal (EUP slot too).
    o_ref[...] = pl.reciprocal(1.0 + jnp.exp(-h3), approx=True)


@functools.partial(jax.jit, static_argnames=("tile_b",))
def discriminator_forward(x, params, tile_b=1024):
    """x: (B, 785) float32 (or bfloat16) -> (B, 1) float32."""
    w1, b1, w2, b2, w3, b3 = params
    B, F = x.shape
    assert F == IN_FEATURES

    # --- batch-tile selection (trace-time Python on static shapes) ----------
    tile_b = max(128, _round_up(tile_b, 128))        # lane-dense output blocks
    tile_b = min(tile_b, _round_up(B, 8))            # don't over-fetch small B
    num_tiles = pl.cdiv(B, tile_b)
    if num_tiles > 1 and num_tiles % 2 == 1:
        # v7x megacore: prefer an even tile count so the two TensorCores see
        # balanced work on the ("parallel",) batch axis.
        tile_even = _round_up(pl.cdiv(B, num_tiles + 1), 128)
        if tile_even >= 128 and pl.cdiv(B, tile_even) % 2 == 0:
            tile_b = tile_even
            num_tiles = pl.cdiv(B, tile_b)
    B_pad = num_tiles * tile_b

    if num_tiles == 1 and B_pad != B:
        # Lone ragged tile (small batch): pad the few missing rows so the only
        # block never exceeds the array extent.  Trivial copy (< tile_b rows).
        x = jnp.pad(x, ((0, B_pad - B), (0, 0)))
    # With num_tiles > 1 the last ragged block over-runs x instead of paying a
    # full-HBM-round-trip jnp.pad: the OOB rows' contents are implementation-
    # defined, their outputs occupy columns >= B of the (1, B_pad) result and
    # are sliced away below.

    out = pl.pallas_call(
        _disc_kernel,
        out_shape=jax.ShapeDtypeStruct((1, B_pad), jnp.float32),
        grid_spec=pltpu.PrefetchScalarGridSpec(
            num_scalar_prefetch=0,
            grid=(num_tiles,),
            in_specs=[
                pl.BlockSpec((tile_b, IN_FEATURES), lambda i: (i, 0)),  # x tile
                pl.BlockSpec((IN_FEATURES, HIDDEN), lambda i: (0, 0)),  # w1 (bf16, resident)
                pl.BlockSpec((1, HIDDEN), lambda i: (0, 0)),            # b1 (f32)
                pl.BlockSpec((HIDDEN, HIDDEN), lambda i: (0, 0)),       # w2 (bf16, resident)
                pl.BlockSpec((1, HIDDEN), lambda i: (0, 0)),            # b2 (f32)
                pl.BlockSpec((1, HIDDEN), lambda i: (0, 0)),            # w3 row (bf16)
                pl.BlockSpec((1, 1), lambda i: (0, 0)),                 # b3 (f32)
            ],
            out_specs=pl.BlockSpec((1, tile_b), lambda i: (0, i)),      # lane-dense
        ),
        compiler_params=pltpu.CompilerParams(
            dimension_semantics=("parallel",),   # batch tiles shard across TCs
            vmem_limit_bytes=32 * 1024 * 1024,   # headroom for tile_b=2048 on v6e/v7x
        ),
    )(x, w1, b1, w2, b2, w3, b3)

    return out[0, :B].reshape(B, 1)


def init_params(key):
    """nn.Linear-style init (uniform +/- 1/sqrt(fan_in)).

    w1/w2 are stored pre-transposed as (in, out) bf16 MXU operands; w3 is a
    bf16 (1, 256) row for the lane-dense final contraction; biases stay f32."""
    def linear(key, fan_in, fan_out, w_dtype):
        kw, kb = jax.random.split(key)
        bound = 1.0 / jnp.sqrt(fan_in)
        w = jax.random.uniform(kw, (fan_in, fan_out), jnp.float32, -bound, bound)
        b = jax.random.uniform(kb, (1, fan_out), jnp.float32, -bound, bound)
        return w.astype(w_dtype), b

    k1, k2, k3 = jax.random.split(key, 3)
    w1, b1 = linear(k1, IN_FEATURES, HIDDEN, jnp.bfloat16)
    w2, b2 = linear(k2, HIDDEN, HIDDEN, jnp.bfloat16)
    w3, b3 = linear(k3, HIDDEN, 1, jnp.bfloat16)
    w3 = w3.T                                   # (1, 256) bf16 row
    return (w1, b1, w2, b2, w3, b3)


def _reference_forward(x, params):
    """Pure-JAX reference using the same bf16-matmul / f32-accumulate recipe."""
    w1, b1, w2, b2, w3, b3 = params
    h = jnp.dot(x.astype(jnp.bfloat16), w1, preferred_element_type=jnp.float32) + b1
    h = jnp.maximum(h, 0.2 * h)
    h = jnp.dot(h.astype(jnp.bfloat16), w2, preferred_element_type=jnp.float32) + b2
    h = jnp.maximum(h, 0.2 * h)
    h = jnp.dot(h.astype(jnp.bfloat16), w3.T, preferred_element_type=jnp.float32) + b3
    return jax.nn.sigmoid(h)


if __name__ == "__main__":
    key = jax.random.PRNGKey(0)
    k_params, k_x = jax.random.split(key)

    params = init_params(k_params)
    # Input: (batch, 785) — flattened 28x28 image (784) + 1 conditioning scalar.
    x = jax.random.normal(k_x, (2, 785), jnp.float32)

    out = discriminator_forward(x, params)
    out = jax.block_until_ready(out)

    ref = _reference_forward(x, params)
    assert out.shape == (2, 1)
    assert jnp.allclose(out, ref, atol=5e-3, rtol=5e-3)

    print("KERNEL_OK")
</pallas_src>

<mosaic_0001>
module attributes {stable_mosaic.version = 11 : i64} {
  func.func @_disc_kernel(%arg0: i32, %arg1: memref<8x785xf32, #tpu.memory_space<vmem>>, %arg2: memref<785x256xbf16, #tpu.memory_space<vmem>>, %arg3: memref<1x256xf32, #tpu.memory_space<vmem>>, %arg4: memref<256x256xbf16, #tpu.memory_space<vmem>>, %arg5: memref<1x256xf32, #tpu.memory_space<vmem>>, %arg6: memref<1x256xbf16, #tpu.memory_space<vmem>>, %arg7: memref<1x1xf32, #tpu.memory_space<vmem>>, %arg8: memref<1x8xf32, #tpu.memory_space<vmem>>) attributes {dimension_semantics = [#tpu.dimension_semantics<parallel>], iteration_bounds = array<i64: 1>, scalar_prefetch = 0 : i64, scratch_operands = 0 : i64, tpu.core_type = #tpu.core_type<tc>, window_params = [{transform_indices = @transform_0, window_bounds = array<i64: 8, 785>}, {pipeline_mode = #tpu.pipeline_mode<synchronous>, transform_indices = @transform_1, window_bounds = array<i64: 785, 256>}, {pipeline_mode = #tpu.pipeline_mode<synchronous>, transform_indices = @transform_2, window_bounds = array<i64: 1, 256>}, {pipeline_mode = #tpu.pipeline_mode<synchronous>, transform_indices = @transform_3, window_bounds = array<i64: 256, 256>}, {pipeline_mode = #tpu.pipeline_mode<synchronous>, transform_indices = @transform_4, window_bounds = array<i64: 1, 256>}, {pipeline_mode = #tpu.pipeline_mode<synchronous>, transform_indices = @transform_5, window_bounds = array<i64: 1, 256>}, {pipeline_mode = #tpu.pipeline_mode<synchronous>, transform_indices = @transform_6, window_bounds = array<i64: 1, 1>}, {transform_indices = @transform_7, window_bounds = array<i64: 1, 8>}]} {
    %c0 = arith.constant 0 : index
    %c0_0 = arith.constant 0 : index
    %0 = vector.load %arg1[%c0, %c0_0] : memref<8x785xf32, #tpu.memory_space<vmem>>, vector<8x785xf32>
    %1 = arith.truncf %0 : vector<8x785xf32> to vector<8x785xbf16>
    %c0_1 = arith.constant 0 : index
    %c0_2 = arith.constant 0 : index
    %2 = vector.load %arg2[%c0_1, %c0_2] : memref<785x256xbf16, #tpu.memory_space<vmem>>, vector<785x256xbf16>
    %cst = arith.constant dense<0.000000e+00> : vector<8x256xf32>
    %3 = tpu.matmul %1, %2, %cst {dimension_numbers = #tpu.dot_dimension_numbers<[1], [0], [0], [1], [0, 0, 1, 1], [], []>} : vector<8x785xbf16>, vector<785x256xbf16>, vector<8x256xf32> -> vector<8x256xf32>
    %c0_3 = arith.constant 0 : index
    %c0_4 = arith.constant 0 : index
    %4 = vector.load %arg3[%c0_3, %c0_4] : memref<1x256xf32, #tpu.memory_space<vmem>>, vector<1x256xf32>
    %5 = vector.broadcast %4 : vector<1x256xf32> to vector<8x256xf32>
    %6 = arith.addf %3, %5 : vector<8x256xf32>
    %cst_5 = arith.constant 2.000000e-01 : f32
    %7 = vector.broadcast %cst_5 : f32 to vector<8x256xf32>
    %8 = arith.mulf %7, %6 : vector<8x256xf32>
    %9 = arith.maximumf %6, %8 : vector<8x256xf32>
    %10 = arith.truncf %9 : vector<8x256xf32> to vector<8x256xbf16>
    %c0_6 = arith.constant 0 : index
    %c0_7 = arith.constant 0 : index
    %11 = vector.load %arg4[%c0_6, %c0_7] : memref<256x256xbf16, #tpu.memory_space<vmem>>, vector<256x256xbf16>
    %cst_8 = arith.constant dense<0.000000e+00> : vector<8x256xf32>
    %12 = tpu.matmul %10, %11, %cst_8 {dimension_numbers = #tpu.dot_dimension_numbers<[1], [0], [0], [1], [0, 0, 1, 1], [], []>} : vector<8x256xbf16>, vector<256x256xbf16>, vector<8x256xf32> -> vector<8x256xf32>
    %c0_9 = arith.constant 0 : index
    %c0_10 = arith.constant 0 : index
    %13 = vector.load %arg5[%c0_9, %c0_10] : memref<1x256xf32, #tpu.memory_space<vmem>>, vector<1x256xf32>
    %14 = vector.broadcast %13 : vector<1x256xf32> to vector<8x256xf32>
    %15 = arith.addf %12, %14 : vector<8x256xf32>
    %cst_11 = arith.constant 2.000000e-01 : f32
    %16 = vector.broadcast %cst_11 : f32 to vector<8x256xf32>
    %17 = arith.mulf %16, %15 : vector<8x256xf32>
    %18 = arith.maximumf %15, %17 : vector<8x256xf32>
    %c0_12 = arith.constant 0 : index
    %c0_13 = arith.constant 0 : index
    %19 = vector.load %arg6[%c0_12, %c0_13] : memref<1x256xbf16, #tpu.memory_space<vmem>>, vector<1x256xbf16>
    %20 = arith.truncf %18 : vector<8x256xf32> to vector<8x256xbf16>
    %cst_14 = arith.constant dense<0.000000e+00> : vector<1x8xf32>
    %21 = tpu.matmul %19, %20, %cst_14 {dimension_numbers = #tpu.dot_dimension_numbers<[1], [1], [0], [0], [0, 0, 1, 0], [], []>} : vector<1x256xbf16>, vector<8x256xbf16>, vector<1x8xf32> -> vector<1x8xf32>
    %c0_15 = arith.constant 0 : index
    %c0_16 = arith.constant 0 : index
    %22 = vector.load %arg7[%c0_15, %c0_16] : memref<1x1xf32, #tpu.memory_space<vmem>>, vector<1x1xf32>
    %23 = vector.broadcast %22 : vector<1x1xf32> to vector<1x8xf32>
    %24 = arith.addf %21, %23 : vector<1x8xf32>
    %cst_17 = arith.constant 0.000000e+00 : f32
    %25 = vector.broadcast %cst_17 : f32 to vector<1x8xf32>
    %26 = arith.subf %25, %24 : vector<1x8xf32>
    %27 = math.exp %26 : vector<1x8xf32>
    %cst_18 = arith.constant 1.000000e+00 : f32
    %28 = vector.broadcast %cst_18 : f32 to vector<1x8xf32>
    %29 = arith.addf %28, %27 : vector<1x8xf32>
    %30 = tpu.reciprocal %29 {approx = true} : vector<1x8xf32> -> vector<1x8xf32>
    %c0_19 = arith.constant 0 : index
    %c0_20 = arith.constant 0 : index
    %31 = vector.load %arg8[%c0_19, %c0_20] : memref<1x8xf32, #tpu.memory_space<vmem>>, vector<1x8xf32>
    tpu.vector_store %arg8[%c0_19, %c0_20], %30 {strides = array<i32>} : memref<1x8xf32, #tpu.memory_space<vmem>>, vector<1x8xf32>,
    return
  }
  func.func @transform_0(%arg0: i32) -> (i32, i32) {
    %c0_i32 = arith.constant 0 : i32
    %c0_i32_0 = arith.constant 0 : i32
    return %arg0, %c0_i32 : i32, i32
  }
  func.func @transform_1(%arg0: i32) -> (i32, i32) {
    %c0_i32 = arith.constant 0 : i32
    %c0_i32_0 = arith.constant 0 : i32
    %c0_i32_1 = arith.constant 0 : i32
    return %c0_i32, %c0_i32_0 : i32, i32
  }
  func.func @transform_2(%arg0: i32) -> (i32, i32) {
    %c0_i32 = arith.constant 0 : i32
    %c0_i32_0 = arith.constant 0 : i32
    %c0_i32_1 = arith.constant 0 : i32
    return %c0_i32, %c0_i32_0 : i32, i32
  }
  func.func @transform_3(%arg0: i32) -> (i32, i32) {
    %c0_i32 = arith.constant 0 : i32
    %c0_i32_0 = arith.constant 0 : i32
    %c0_i32_1 = arith.constant 0 : i32
    return %c0_i32, %c0_i32_0 : i32, i32
  }
  func.func @transform_4(%arg0: i32) -> (i32, i32) {
    %c0_i32 = arith.constant 0 : i32
    %c0_i32_0 = arith.constant 0 : i32
    %c0_i32_1 = arith.constant 0 : i32
    return %c0_i32, %c0_i32_0 : i32, i32
  }
  func.func @transform_5(%arg0: i32) -> (i32, i32) {
    %c0_i32 = arith.constant 0 : i32
    %c0_i32_0 = arith.constant 0 : i32
    %c0_i32_1 = arith.constant 0 : i32
    return %c0_i32, %c0_i32_0 : i32, i32
  }
  func.func @transform_6(%arg0: i32) -> (i32, i32) {
    %c0_i32 = arith.constant 0 : i32
    %c0_i32_0 = arith.constant 0 : i32
    %c0_i32_1 = arith.constant 0 : i32
    return %c0_i32, %c0_i32_0 : i32, i32
  }
  func.func @transform_7(%arg0: i32) -> (i32, i32) {
    %c0_i32 = arith.constant 0 : i32
    %c0_i32_0 = arith.constant 0 : i32
    return %c0_i32, %arg0 : i32, i32
  }
}

</mosaic_0001>

<llo_original>
// kernel: discriminator_forward.1
$region0: #{discriminator_forward.1}
  #allocation0 [shape = 'u32[]', space=smem, size = 0x4, offset = 0x4, fixed_abs, tag = 'smem constant byte address 0x4 - core index']
  #allocation1 [shape = 'u32[144,128]{1,0:T(1,128)}', space=vmem, size = 0x12000, scoped, tag = 'internal scratch']
  #allocation2 [shape = 'f32[1,1]{1,0:T(1,128)S(1)}', space=vmem, size = 0x200, scoped, tag = 'scoped memory for discriminator_forward.1']
  %s0 = inlined_call_operand.vmem [shape: f32[8,785], index: 0, kind: input, shape index: {}]
  %s1 = inlined_call_operand.hbm [shape: bf16[785,256], index: 1, kind: input, shape index: {}]
  %s2 = inlined_call_operand.vmem [shape: f32[1,256], index: 2, kind: input, shape index: {}]
  %s3 = inlined_call_operand.hbm [shape: bf16[256,256], index: 3, kind: input, shape index: {}]
  %s4 = inlined_call_operand.vmem [shape: f32[1,256], index: 4, kind: input, shape index: {}]
  %s5 = inlined_call_operand.vmem [shape: bf16[1,256], index: 5, kind: input, shape index: {}]
  %s6 = inlined_call_operand.<no memory space> [shape: f32[1,1], index: 6, kind: input, shape index: {}]
  %s7 = inlined_call_operand.vmem [shape: f32[1,8], index: 7, kind: output, shape index: {}]
  %s8 = sld [smem:[#allocation0]]
  $region46: #{discriminator_forward.1} parent=0
    _
  %s10 = ssub.s32 1, %s8
  %s11 = scalar_select 0, %s10, %s8
  %v12 = vstv %s6
  %13 = vst [vmem:[#allocation2] sm:$0x1] %v12
  $region1: #{discriminator_forward.1} parent=0
    #allocation3 [shape = 'u8[405504]{0}', space=vmem, size = 0x63000, scoped, tag = 'input window, operand 1, single buffered']
    #allocation4 [shape = 's32[1]{0}', space=sflag, size = 0x4, scoped, tag = 'scoped memory for discriminator_forward.1']
    #allocation5 [shape = 'u8[131072]{0}', space=vmem, size = 0x20000, scoped, tag = 'input window, operand 3, single buffered']
    #allocation6 [shape = 's32[1]{0}', space=sflag, size = 0x4, scoped, tag = 'scoped memory for discriminator_forward.1']
    %14 = vsyncpa [#allocation4], 0
    %15 = vsyncpa [#allocation6], 0
    // Predicated region
    $region2: #{discriminator_forward.1} parent=1 // pred_check
      _
    $region3: #{discriminator_forward.1} parent=1 // pred_check_branch
      %17 = sbr.rel (0) target = $region5
    $region4: #{discriminator_forward.1} parent=1 // pred_region
      _
    $region5: #{discriminator_forward.1} parent=1 // pred_fallthru
      _
    // Predicated region
    $region6: #{discriminator_forward.1} parent=1 // pred_check
      _
    $region7: #{discriminator_forward.1} parent=1 // pred_check_branch
      %19 = sbr.rel (0) target = $region9
    $region8: #{discriminator_forward.1} parent=1 // pred_region
      %s21 = ssub.s32 12672, 12672
      %22 = vsyncadd [#allocation4], %s21
      %s23 = sshll.u32 [#allocation3], 4
      %s24 = int_to_ptr.vmem [resolvable:$true] %s23
      %29 = dma.hbm_to_vmem [thread:$0]  %s1, 12672, %s24, [#allocation4], 128, 128, 8
    $region9: #{discriminator_forward.1} parent=1 // pred_fallthru
      _
    // Predicated region
    $region10: #{discriminator_forward.1} parent=1 // pred_check
      _
    $region11: #{discriminator_forward.1} parent=1 // pred_check_branch
      %31 = sbr.rel (0) target = $region13
    $region12: #{discriminator_forward.1} parent=1 // pred_region
      _
    $region13: #{discriminator_forward.1} parent=1 // pred_fallthru
      _
    // Predicated region
    $region14: #{discriminator_forward.1} parent=1 // pred_check
      _
    $region15: #{discriminator_forward.1} parent=1 // pred_check_branch
      %33 = sbr.rel (0) target = $region17
    $region16: #{discriminator_forward.1} parent=1 // pred_region
      %s35 = ssub.s32 4096, 4096
      %36 = vsyncadd [#allocation6], %s35
      %s37 = sshll.u32 [#allocation5], 4
      %s38 = int_to_ptr.vmem [resolvable:$true] %s37
      %43 = dma.hbm_to_vmem [thread:$0]  %s3, 4096, %s38, [#allocation6], 128, 128, 8
    $region17: #{discriminator_forward.1} parent=1 // pred_fallthru
      _
    // Predicated region
    $region18: #{discriminator_forward.1} parent=1 // pred_check
      _
    $region19: #{discriminator_forward.1} parent=1 // pred_check_branch
      %45 = sbr.rel (0) target = $region21
    $region20: #{discriminator_forward.1} parent=1 // pred_region
      _
    $region21: #{discriminator_forward.1} parent=1 // pred_fallthru
      _
    // Predicated region
    $region22: #{discriminator_forward.1} parent=1 // pred_check
      _
    $region23: #{discriminator_forward.1} parent=1 // pred_check_branch
      %47 = sbr.rel (0) target = $region25
    $region24: #{discriminator_forward.1} parent=1 // pred_region
      _
    $region25: #{discriminator_forward.1} parent=1 // pred_fallthru
      _
    // Predicated region
    $region26: #{discriminator_forward.1} parent=1 // pred_check
      _
    $region27: #{discriminator_forward.1} parent=1 // pred_check_branch
      %49 = sbr.rel (0) target = $region29
    $region28: #{discriminator_forward.1} parent=1 // pred_region
      _
    $region29: #{discriminator_forward.1} parent=1 // pred_fallthru
      _
    // Predicated region
    $region30: #{discriminator_forward.1} parent=1 // pred_check
      _
    $region31: #{discriminator_forward.1} parent=1 // pred_check_branch
      %51 = sbr.rel (0) target = $region33
    $region32: #{discriminator_forward.1} parent=1 // pred_region
      %52 = dma.done [#allocation4], 12672
    $region33: #{discriminator_forward.1} parent=1 // pred_fallthru
      _
    // Predicated region
    $region34: #{discriminator_forward.1} parent=1 // pred_check
      _
    $region35: #{discriminator_forward.1} parent=1 // pred_check_branch
      %54 = sbr.rel (0) target = $region37
    $region36: #{discriminator_forward.1} parent=1 // pred_region
      %55 = dma.done [#allocation6], 4096
    $region37: #{discriminator_forward.1} parent=1 // pred_fallthru
      _
    %v57 = vld [vmem:[%s0] sm:$0xff]
    %v58 = vld [vmem:[%s0 + $0x8] sm:$0xff]
    %v59 = vld [vmem:[%s0 + $0x10] sm:$0xff]
    %v60 = vld [vmem:[%s0 + $0x18] sm:$0xff]
    %v61 = vld [vmem:[%s0 + $0x20] sm:$0xff]
    %v62 = vld [vmem:[%s0 + $0x28] sm:$0xff]
    %v63 = vld [vmem:[%s0 + $0x30] sm:$0xff]
    %v64 = vpack.c.bf16 %v57, %v57
    %v65 = vpack.c.bf16 %v58, %v58
    %v66 = vpack.c.bf16 %v59, %v59
    %v67 = vpack.c.bf16 %v60, %v60
    %v68 = vpack.c.bf16 %v61, %v61
    %v69 = vpack.c.bf16 %v62, %v62
    %v70 = vpack.c.bf16 %v63, %v63
    %v71 = vld [vmem:[#allocation3] sm:$0xff]
    %v72 = vld [vmem:[#allocation3 + $0x8] sm:$0xff]
    %v73 = vld [vmem:[#allocation3 + $0x10] sm:$0xff]
    %v74 = vld [vmem:[#allocation3 + $0x18] sm:$0xff]
    %v75 = vld [vmem:[#allocation3 + $0x20] sm:$0xff]
    %v76 = vld [vmem:[#allocation3 + $0x28] sm:$0xff]
    %v77 = vld [vmem:[#allocation3 + $0x30] sm:$0xff]
    %v78 = vld [vmem:[#allocation3 + $0x38] sm:$0xff]
    %v79 = vld [vmem:[#allocation3 + $0x40] sm:$0xff]
    %v80 = vld [vmem:[#allocation3 + $0x48] sm:$0xff]
    %v81 = vld [vmem:[#allocation3 + $0x50] sm:$0xff]
    %v82 = vld [vmem:[#allocation3 + $0x58] sm:$0xff]
    %v83 = vld [vmem:[#allocation3 + $0x60] sm:$0xff]
    %v84 = vld [vmem:[#allocation3 + $0x68] sm:$0xff]
    %v85 = vld [vmem:[#allocation3 + $0x70] sm:$0xff]
    %v86 = vld [vmem:[#allocation3 + $0x78] sm:$0xff]
    %v87 = vld [vmem:[#allocation3 + $0x80] sm:$0xff]
    %v88 = vld [vmem:[#allocation3 + $0x88] sm:$0xff]
    %v89 = vld [vmem:[#allocation3 + $0x90] sm:$0xff]
    %v90 = vld [vmem:[#allocation3 + $0x98] sm:$0xff]
    %v91 = vld [vmem:[#allocation3 + $0xa0] sm:$0xff]
    %v92 = vld [vmem:[#allocation3 + $0xa8] sm:$0xff]
    %v93 = vld [vmem:[#allocation3 + $0xb0] sm:$0xff]
    %v94 = vld [vmem:[#allocation3 + $0xb8] sm:$0xff]
    %v95 = vld [vmem:[#allocation3 + $0xc0] sm:$0xff]
    %v96 = vld [vmem:[#allocation3 + $0xc8] sm:$0xff]
    %v97 = vld [vmem:[#allocation3 + $0xd0] sm:$0xff]
    %v98 = vld [vmem:[#allocation3 + $0xd8] sm:$0xff]
    %v99 = vld [vmem:[#allocation3 + $0xe0] sm:$0xff]
    %v100 = vld [vmem:[#allocation3 + $0xe8] sm:$0xff]
    %v101 = vld [vmem:[#allocation3 + $0xf0] sm:$0xff]
    %v102 = vld [vmem:[#allocation3 + $0xf8] sm:$0xff]
    %v103 = vld [vmem:[#allocation3 + $0x100] sm:$0xff]
    %v104 = vld [vmem:[#allocation3 + $0x108] sm:$0xff]
    %v105 = vld [vmem:[#allocation3 + $0x110] sm:$0xff]
    %v106 = vld [vmem:[#allocation3 + $0x118] sm:$0xff]
    %v107 = vld [vmem:[#allocation3 + $0x120] sm:$0xff]
    %v108 = vld [vmem:[#allocation3 + $0x128] sm:$0xff]
    %v109 = vld [vmem:[#allocation3 + $0x130] sm:$0xff]
    %v110 = vld [vmem:[#allocation3 + $0x138] sm:$0xff]
    %v111 = vld [vmem:[#allocation3 + $0x140] sm:$0xff]
    %v112 = vld [vmem:[#allocation3 + $0x148] sm:$0xff]
    %v113 = vld [vmem:[#allocation3 + $0x150] sm:$0xff]
    %v114 = vld [vmem:[#allocation3 + $0x158] sm:$0xff]
    %v115 = vld [vmem:[#allocation3 + $0x160] sm:$0xff]
    %v116 = vld [vmem:[#allocation3 + $0x168] sm:$0xff]
    %v117 = vld [vmem:[#allocation3 + $0x170] sm:$0xff]
    %v118 = vld [vmem:[#allocation3 + $0x178] sm:$0xff]
    %v119 = vld [vmem:[#allocation3 + $0x180] sm:$0xff]
    %v120 = vld [vmem:[#allocation3 + $0x188] sm:$0xff]
    %v121 = vld [vmem:[#allocation3 + $0x190] sm:$0xff]
    %v122 = vld [vmem:[#allocation3 + $0x198] sm:$0xff]
    %v123 = vld [vmem:[#allocation3 + $0x1a0] sm:$0xff]
    %v124 = vld [vmem:[#allocation3 + $0x1a8] sm:$0xff]
    %v125 = vld [vmem:[#allocation3 + $0x1b0] sm:$0xff]
    %v126 = vld [vmem:[#allocation3 + $0x1b8] sm:$0xff]
    %v127 = vld [vmem:[#allocation3 + $0x1c0] sm:$0xff]
    %v128 = vld [vmem:[#allocation3 + $0x1c8] sm:$0xff]
    %v129 = vld [vmem:[#allocation3 + $0x1d0] sm:$0xff]
    %v130 = vld [vmem:[#allocation3 + $0x1d8] sm:$0xff]
    %v131 = vld [vmem:[#allocation3 + $0x1e0] sm:$0xff]
    %v132 = vld [vmem:[#allocation3 + $0x1e8] sm:$0xff]
    %v133 = vld [vmem:[#allocation3 + $0x1f0] sm:$0xff]
    %v134 = vld [vmem:[#allocation3 + $0x1f8] sm:$0xff]
    %v135 = vld [vmem:[#allocation3 + $0x200] sm:$0xff]
    %v136 = vld [vmem:[#allocation3 + $0x208] sm:$0xff]
    %v137 = vld [vmem:[#allocation3 + $0x210] sm:$0xff]
    %v138 = vld [vmem:[#allocation3 + $0x218] sm:$0xff]
    %v139 = vld [vmem:[#allocation3 + $0x220] sm:$0xff]
    %v140 = vld [vmem:[#allocation3 + $0x228] sm:$0xff]
    %v141 = vld [vmem:[#allocation3 + $0x230] sm:$0xff]
    %v142 = vld [vmem:[#allocation3 + $0x238] sm:$0xff]
    %v143 = vld [vmem:[#allocation3 + $0x240] sm:$0xff]
    %v144 = vld [vmem:[#allocation3 + $0x248] sm:$0xff]
    %v145 = vld [vmem:[#allocation3 + $0x250] sm:$0xff]
    %v146 = vld [vmem:[#allocation3 + $0x258] sm:$0xff]
    %v147 = vld [vmem:[#allocation3 + $0x260] sm:$0xff]
    %v148 = vld [vmem:[#allocation3 + $0x268] sm:$0xff]
    %v149 = vld [vmem:[#allocation3 + $0x270] sm:$0xff]
    %v150 = vld [vmem:[#allocation3 + $0x278] sm:$0xff]
    %v151 = vld [vmem:[#allocation3 + $0x280] sm:$0xff]
    %v152 = vld [vmem:[#allocation3 + $0x288] sm:$0xff]
    %v153 = vld [vmem:[#allocation3 + $0x290] sm:$0xff]
    %v154 = vld [vmem:[#allocation3 + $0x298] sm:$0xff]
    %v155 = vld [vmem:[#allocation3 + $0x2a0] sm:$0xff]
    %v156 = vld [vmem:[#allocation3 + $0x2a8] sm:$0xff]
    %v157 = vld [vmem:[#allocation3 + $0x2b0] sm:$0xff]
    %v158 = vld [vmem:[#allocation3 + $0x2b8] sm:$0xff]
    %v159 = vld [vmem:[#allocation3 + $0x2c0] sm:$0xff]
    %v160 = vld [vmem:[#allocation3 + $0x2c8] sm:$0xff]
    %v161 = vld [vmem:[#allocation3 + $0x2d0] sm:$0xff]
    %v162 = vld [vmem:[#allocation3 + $0x2d8] sm:$0xff]
    %v163 = vld [vmem:[#allocation3 + $0x2e0] sm:$0xff]
    %v164 = vld [vmem:[#allocation3 + $0x2e8] sm:$0xff]
    %v165 = vld [vmem:[#allocation3 + $0x2f0] sm:$0xff]
    %v166 = vld [vmem:[#allocation3 + $0x2f8] sm:$0xff]
    %v167 = vld [vmem:[#allocation3 + $0x300] sm:$0xff]
    %v168 = vld [vmem:[#allocation3 + $0x308] sm:$0xff]
    %v169 = vld [vmem:[#allocation3 + $0x310] sm:$0x11]
    %v170 = vld [vmem:[%s2] sm:$0x3]
    %v172 = vlaneseq
    %v173 = vshrl.u32 %v172, 7
    %v174 = vsub.s32 0, %v173
    %v175 = vrot.slane %v170, %v174
    %v176 = vlaneseq
    %v177 = vshrl.u32 %v176, 7
    %v178 = vsub.s32 1, %v177
    %v179 = vrot.slane %v170, %v178
    %v281 = vunpack.c.l.b16 %v71
    %v282 = vunpack.c.h.b16 %v71
    %v283 = vunpack.c.l.b16 %v72
    %v284 = vunpack.c.h.b16 %v72
    %v285 = vunpack.c.l.b16 %v73
    %v286 = vunpack.c.h.b16 %v73
    %v287 = vunpack.c.l.b16 %v74
    %v288 = vunpack.c.h.b16 %v74
    %v289 = vunpack.c.l.b16 %v75
    %v290 = vunpack.c.h.b16 %v75
    %v291 = vunpack.c.l.b16 %v76
    %v292 = vunpack.c.h.b16 %v76
    %v293 = vunpack.c.l.b16 %v77
    %v294 = vunpack.c.h.b16 %v77
    %v295 = vunpack.c.l.b16 %v78
    %v296 = vunpack.c.h.b16 %v78
    %v297 = vunpack.c.l.b16 %v79
    %v298 = vunpack.c.h.b16 %v79
    %v299 = vunpack.c.l.b16 %v80
    %v300 = vunpack.c.h.b16 %v80
    %v301 = vunpack.c.l.b16 %v81
    %v302 = vunpack.c.h.b16 %v81
    %v303 = vunpack.c.l.b16 %v82
    %v304 = vunpack.c.h.b16 %v82
    %v305 = vunpack.c.l.b16 %v83
    %v306 = vunpack.c.h.b16 %v83
    %v307 = vunpack.c.l.b16 %v84
    %v308 = vunpack.c.h.b16 %v84
    %v309 = vunpack.c.l.b16 %v85
    %v310 = vunpack.c.h.b16 %v85
    %v311 = vunpack.c.l.b16 %v86
    %v312 = vunpack.c.h.b16 %v86
    %v313 = vunpack.c.l.b16 %v87
    %v314 = vunpack.c.h.b16 %v87
    %v315 = vunpack.c.l.b16 %v88
    %v316 = vunpack.c.h.b16 %v88
    %v317 = vunpack.c.l.b16 %v89
    %v318 = vunpack.c.h.b16 %v89
    %v319 = vunpack.c.l.b16 %v90
    %v320 = vunpack.c.h.b16 %v90
    %v321 = vunpack.c.l.b16 %v91
    %v322 = vunpack.c.h.b16 %v91
    %v323 = vunpack.c.l.b16 %v92
    %v324 = vunpack.c.h.b16 %v92
    %v325 = vunpack.c.l.b16 %v93
    %v326 = vunpack.c.h.b16 %v93
    %v327 = vunpack.c.l.b16 %v94
    %v328 = vunpack.c.h.b16 %v94
    %v329 = vunpack.c.l.b16 %v95
    %v330 = vunpack.c.h.b16 %v95
    %v331 = vunpack.c.l.b16 %v96
    %v332 = vunpack.c.h.b16 %v96
    %v333 = vunpack.c.l.b16 %v97
    %v334 = vunpack.c.h.b16 %v97
    %v335 = vunpack.c.l.b16 %v98
    %v336 = vunpack.c.h.b16 %v98
    %v337 = vunpack.c.l.b16 %v99
    %v338 = vunpack.c.h.b16 %v99
    %v339 = vunpack.c.l.b16 %v100
    %v340 = vunpack.c.h.b16 %v100
    %v341 = vunpack.c.l.b16 %v101
    %v342 = vunpack.c.h.b16 %v101
    %v343 = vunpack.c.l.b16 %v102
    %v344 = vunpack.c.h.b16 %v102
    %v345 = vunpack.c.l.b16 %v103
    %v346 = vunpack.c.h.b16 %v103
    %v347 = vunpack.c.l.b16 %v104
    %v348 = vunpack.c.h.b16 %v104
    %v349 = vunpack.c.l.b16 %v105
    %v350 = vunpack.c.h.b16 %v105
    %v351 = vunpack.c.l.b16 %v106
    %v352 = vunpack.c.h.b16 %v106
    %v353 = vunpack.c.l.b16 %v107
    %v354 = vunpack.c.h.b16 %v107
    %v355 = vunpack.c.l.b16 %v108
    %v356 = vunpack.c.h.b16 %v108
    %v357 = vunpack.c.l.b16 %v109
    %v358 = vunpack.c.h.b16 %v109
    %v359 = vunpack.c.l.b16 %v110
    %v360 = vunpack.c.h.b16 %v110
    %v361 = vunpack.c.l.b16 %v111
    %v362 = vunpack.c.h.b16 %v111
    %v363 = vunpack.c.l.b16 %v112
    %v364 = vunpack.c.h.b16 %v112
    %v365 = vunpack.c.l.b16 %v113
    %v366 = vunpack.c.h.b16 %v113
    %v367 = vunpack.c.l.b16 %v114
    %v368 = vunpack.c.h.b16 %v114
    %v369 = vunpack.c.l.b16 %v115
    %v370 = vunpack.c.h.b16 %v115
    %v371 = vunpack.c.l.b16 %v116
    %v372 = vunpack.c.h.b16 %v116
    %v373 = vunpack.c.l.b16 %v117
    %v374 = vunpack.c.h.b16 %v117
    %v375 = vunpack.c.l.b16 %v118
    %v376 = vunpack.c.h.b16 %v118
    %v377 = vunpack.c.l.b16 %v119
    %v378 = vunpack.c.h.b16 %v119
    %v379 = vunpack.c.l.b16 %v120
    %v380 = vunpack.c.h.b16 %v120
    %v381 = vunpack.c.l.b16 %v121
    %v382 = vunpack.c.h.b16 %v121
    %v383 = vunpack.c.l.b16 %v122
    %v384 = vunpack.c.h.b16 %v122
    %v385 = vunpack.c.l.b16 %v123
    %v386 = vunpack.c.h.b16 %v123
    %v387 = vunpack.c.l.b16 %v124
    %v388 = vunpack.c.h.b16 %v124
    %v389 = vunpack.c.l.b16 %v125
    %v390 = vunpack.c.h.b16 %v125
    %v391 = vunpack.c.l.b16 %v126
    %v392 = vunpack.c.h.b16 %v126
    %v393 = vunpack.c.l.b16 %v127
    %v394 = vunpack.c.h.b16 %v127
    %v395 = vunpack.c.l.b16 %v128
    %v396 = vunpack.c.h.b16 %v128
    %v397 = vunpack.c.l.b16 %v129
    %v398 = vunpack.c.h.b16 %v129
    %v399 = vunpack.c.l.b16 %v130
    %v400 = vunpack.c.h.b16 %v130
    %v401 = vunpack.c.l.b16 %v131
    %v402 = vunpack.c.h.b16 %v131
    %v403 = vunpack.c.l.b16 %v132
    %v404 = vunpack.c.h.b16 %v132
    %v405 = vunpack.c.l.b16 %v133
    %v406 = vunpack.c.h.b16 %v133
    %v407 = vunpack.c.l.b16 %v134
    %v408 = vunpack.c.h.b16 %v134
    %v409 = vunpack.c.l.b16 %v135
    %v410 = vunpack.c.h.b16 %v135
    %v411 = vunpack.c.l.b16 %v136
    %v412 = vunpack.c.h.b16 %v136
    %v413 = vunpack.c.l.b16 %v137
    %v414 = vunpack.c.h.b16 %v137
    %v415 = vunpack.c.l.b16 %v138
    %v416 = vunpack.c.h.b16 %v138
    %v417 = vunpack.c.l.b16 %v139
    %v418 = vunpack.c.h.b16 %v139
    %v419 = vunpack.c.l.b16 %v140
    %v420 = vunpack.c.h.b16 %v140
    %v421 = vunpack.c.l.b16 %v141
    %v422 = vunpack.c.h.b16 %v141
    %v423 = vunpack.c.l.b16 %v142
    %v424 = vunpack.c.h.b16 %v142
    %v425 = vunpack.c.l.b16 %v143
    %v426 = vunpack.c.h.b16 %v143
    %v427 = vunpack.c.l.b16 %v144
    %v428 = vunpack.c.h.b16 %v144
    %v429 = vunpack.c.l.b16 %v145
    %v430 = vunpack.c.h.b16 %v145
    %v431 = vunpack.c.l.b16 %v146
    %v432 = vunpack.c.h.b16 %v146
    %v433 = vunpack.c.l.b16 %v147
    %v434 = vunpack.c.h.b16 %v147
    %v435 = vunpack.c.l.b16 %v148
    %v436 = vunpack.c.h.b16 %v148
    %v437 = vunpack.c.l.b16 %v149
    %v438 = vunpack.c.h.b16 %v149
    %v439 = vunpack.c.l.b16 %v150
    %v440 = vunpack.c.h.b16 %v150
    %v441 = vunpack.c.l.b16 %v151
    %v442 = vunpack.c.h.b16 %v151
    %v443 = vunpack.c.l.b16 %v152
    %v444 = vunpack.c.h.b16 %v152
    %v445 = vunpack.c.l.b16 %v153
    %v446 = vunpack.c.h.b16 %v153
    %v447 = vunpack.c.l.b16 %v154
    %v448 = vunpack.c.h.b16 %v154
    %v449 = vunpack.c.l.b16 %v155
    %v450 = vunpack.c.h.b16 %v155
    %v451 = vunpack.c.l.b16 %v156
    %v452 = vunpack.c.h.b16 %v156
    %v453 = vunpack.c.l.b16 %v157
    %v454 = vunpack.c.h.b16 %v157
    %v455 = vunpack.c.l.b16 %v158
    %v456 = vunpack.c.h.b16 %v158
    %v457 = vunpack.c.l.b16 %v159
    %v458 = vunpack.c.h.b16 %v159
    %v459 = vunpack.c.l.b16 %v160
    %v460 = vunpack.c.h.b16 %v160
    %v461 = vunpack.c.l.b16 %v161
    %v462 = vunpack.c.h.b16 %v161
    %v463 = vunpack.c.l.b16 %v162
    %v464 = vunpack.c.h.b16 %v162
    %v465 = vunpack.c.l.b16 %v163
    %v466 = vunpack.c.h.b16 %v163
    %v467 = vunpack.c.l.b16 %v164
    %v468 = vunpack.c.h.b16 %v164
    %v469 = vunpack.c.l.b16 %v165
    %v470 = vunpack.c.h.b16 %v165
    %v471 = vunpack.c.l.b16 %v166
    %v472 = vunpack.c.h.b16 %v166
    %v473 = vunpack.c.l.b16 %v167
    %v474 = vunpack.c.h.b16 %v167
    %v475 = vunpack.c.l.b16 %v168
    %v476 = vunpack.c.h.b16 %v168
    %v477 = vunpack.c.l.b16 %v169
    %v478 = vunpack.c.h.b16 %v169
    %v479 = vpack.c.b16 %v283, %v281
    %v480 = vpack.c.b16 %v284, %v282
    %v481 = vpack.c.b16 %v287, %v285
    %v482 = vpack.c.b16 %v288, %v286
    %v483 = vpack.c.b16 %v291, %v289
    %v484 = vpack.c.b16 %v292, %v290
    %v485 = vpack.c.b16 %v295, %v293
    %v486 = vpack.c.b16 %v296, %v294
    %v487 = vpack.c.b16 %v299, %v297
    %v488 = vpack.c.b16 %v300, %v298
    %v489 = vpack.c.b16 %v303, %v301
    %v490 = vpack.c.b16 %v304, %v302
    %v491 = vpack.c.b16 %v307, %v305
    %v492 = vpack.c.b16 %v308, %v306
    %v493 = vpack.c.b16 %v311, %v309
    %v494 = vpack.c.b16 %v312, %v310
    %v495 = vpack.c.b16 %v315, %v313
    %v496 = vpack.c.b16 %v316, %v314
    %v497 = vpack.c.b16 %v319, %v317
    %v498 = vpack.c.b16 %v320, %v318
    %v499 = vpack.c.b16 %v323, %v321
    %v500 = vpack.c.b16 %v324, %v322
    %v501 = vpack.c.b16 %v327, %v325
    %v502 = vpack.c.b16 %v328, %v326
    %v503 = vpack.c.b16 %v331, %v329
    %v504 = vpack.c.b16 %v332, %v330
    %v505 = vpack.c.b16 %v335, %v333
    %v506 = vpack.c.b16 %v336, %v334
    %v507 = vpack.c.b16 %v339, %v337
    %v508 = vpack.c.b16 %v340, %v338
    %v509 = vpack.c.b16 %v343, %v341
    %v510 = vpack.c.b16 %v344, %v342
    %v511 = vpack.c.b16 %v347, %v345
    %v512 = vpack.c.b16 %v348, %v346
    %v513 = vpack.c.b16 %v351, %v349
    %v514 = vpack.c.b16 %v352, %v350
    %v515 = vpack.c.b16 %v355, %v353
    %v516 = vpack.c.b16 %v356, %v354
    %v517 = vpack.c.b16 %v359, %v357
    %v518 = vpack.c.b16 %v360, %v358
    %v519 = vpack.c.b16 %v363, %v361
    %v520 = vpack.c.b16 %v364, %v362
    %v521 = vpack.c.b16 %v367, %v365
    %v522 = vpack.c.b16 %v368, %v366
    %v523 = vpack.c.b16 %v371, %v369
    %v524 = vpack.c.b16 %v372, %v370
    %v525 = vpack.c.b16 %v375, %v373
    %v526 = vpack.c.b16 %v376, %v374
    %v527 = vpack.c.b16 %v379, %v377
    %v528 = vpack.c.b16 %v380, %v378
    %v529 = vpack.c.b16 %v383, %v381
    %v530 = vpack.c.b16 %v384, %v382
    %v531 = vpack.c.b16 %v387, %v385
    %v532 = vpack.c.b16 %v388, %v386
    %v533 = vpack.c.b16 %v391, %v389
    %v534 = vpack.c.b16 %v392, %v390
    %v535 = vpack.c.b16 %v395, %v393
    %v536 = vpack.c.b16 %v396, %v394
    %v537 = vpack.c.b16 %v399, %v397
    %v538 = vpack.c.b16 %v400, %v398
    %v539 = vpack.c.b16 %v403, %v401
    %v540 = vpack.c.b16 %v404, %v402
    %v541 = vpack.c.b16 %v407, %v405
    %v542 = vpack.c.b16 %v408, %v406
    %v543 = vpack.c.b16 %v411, %v409
    %v544 = vpack.c.b16 %v412, %v410
    %v545 = vpack.c.b16 %v415, %v413
    %v546 = vpack.c.b16 %v416, %v414
    %v547 = vpack.c.b16 %v419, %v417
    %v548 = vpack.c.b16 %v420, %v418
    %v549 = vpack.c.b16 %v423, %v421
    %v550 = vpack.c.b16 %v424, %v422
    %v551 = vpack.c.b16 %v427, %v425
    %v552 = vpack.c.b16 %v428, %v426
    %v553 = vpack.c.b16 %v431, %v429
    %v554 = vpack.c.b16 %v432, %v430
    %v555 = vpack.c.b16 %v435, %v433
    %v556 = vpack.c.b16 %v436, %v434
    %v557 = vpack.c.b16 %v439, %v437
    %v558 = vpack.c.b16 %v440, %v438
    %v559 = vpack.c.b16 %v443, %v441
    %v560 = vpack.c.b16 %v444, %v442
    %v561 = vpack.c.b16 %v447, %v445
    %v562 = vpack.c.b16 %v448, %v446
    %v563 = vpack.c.b16 %v451, %v449
    %v564 = vpack.c.b16 %v452, %v450
    %v565 = vpack.c.b16 %v455, %v453
    %v566 = vpack.c.b16 %v456, %v454
    %v567 = vpack.c.b16 %v459, %v457
    %v568 = vpack.c.b16 %v460, %v458
    %v569 = vpack.c.b16 %v463, %v461
    %v570 = vpack.c.b16 %v464, %v462
    %v571 = vpack.c.b16 %v467, %v465
    %v572 = vpack.c.b16 %v468, %v466
    %v573 = vpack.c.b16 %v471, %v469
    %v574 = vpack.c.b16 %v472, %v470
    %v575 = vpack.c.b16 %v475, %v473
    %v576 = vpack.c.b16 %v476, %v474
    %v577 = vpack.c.b16 %v477, %v477
    %v578 = vpack.c.b16 %v478, %v478
    %vm677 = vcmask 138240
    %v679 = vsel %vm677, %v70, 0
    %vm681 = vcmask 1040384
    %v682 = vsel 0, 4294967295, 65535
    %v683 = vsel %vm681, %v682, 0
    %v685 = vand.u32 %v577, %v683
    %v688 = vand.u32 %v578, %v683
    %690 = vmatprep.subr.bf16.mxu0 %v494
    %691 = vmatpush1.bf16.msra.mxu0 %v493
    %692 = vmatprep.subr.bf16.mxu0 %v492
    %693 = vmatpush1.bf16.msra.mxu0 %v491
    %694 = vmatprep.subr.bf16.mxu0 %v490
    %695 = vmatpush1.bf16.msra.mxu0 %v489
    %696 = vmatprep.subr.bf16.mxu0 %v488
    %697 = vmatpush1.bf16.msra.mxu0 %v487
    %698 = vmatprep.subr.bf16.mxu0 %v486
    %699 = vmatpush1.bf16.msra.mxu0 %v485
    %700 = vmatprep.subr.bf16.mxu0 %v484
    %701 = vmatpush1.bf16.msra.mxu0 %v483
    %702 = vmatprep.subr.bf16.mxu0 %v482
    %703 = vmatpush1.bf16.msra.mxu0 %v481
    %704 = vmatprep.subr.bf16.mxu0 %v480
    %705 = vmatpush1.bf16.msra.mxu0 %v479
    %706 = vmatprep.subr.bf16.mxu0 %v510
    %707 = vmatpush2.bf16.msra.mxu0 %v509
    %708 = vmatprep.subr.bf16.mxu0 %v508
    %709 = vmatpush2.bf16.msra.mxu0 %v507
    %710 = vmatprep.subr.bf16.mxu0 %v506
    %711 = vmatpush2.bf16.msra.mxu0 %v505
    %712 = vmatprep.subr.bf16.mxu0 %v504
    %713 = vmatpush2.bf16.msra.mxu0 %v503
    %714 = vmatprep.subr.bf16.mxu0 %v502
    %715 = vmatpush2.bf16.msra.mxu0 %v501
    %716 = vmatprep.subr.bf16.mxu0 %v500
    %717 = vmatpush2.bf16.msra.mxu0 %v499
    %718 = vmatprep.subr.bf16.mxu0 %v498
    %719 = vmatpush2.bf16.msra.mxu0 %v497
    %720 = vmatprep.subr.bf16.mxu0 %v496
    %721 = vmatpush2.bf16.msra.mxu0 %v495
    %722 = vmatprep.mubr.bf16.mxu0 %v65
    %723 = vmatmul.mubr.bf16.gmra.mxu0 %v64
    %v724 = vpop.f32.mrf.mxu0
    %v725 = vadd.f32 %v175, %v724
    %v726 = vpop.f32.mrf.mxu0
    %v727 = vadd.f32 %v179, %v726
    %v728 = vpop.f32.mrf.mxu0
    %v729 = vpop.f32.mrf.mxu0
    %730 = vdwg.mxu0
    %731 = vmatprep.subr.bf16.mxu0 %v526
    %732 = vmatpush1.bf16.msra.mxu0 %v525
    %733 = vmatprep.subr.bf16.mxu0 %v524
    %734 = vmatpush1.bf16.msra.mxu0 %v523
    %735 = vmatprep.subr.bf16.mxu0 %v522
    %736 = vmatpush1.bf16.msra.mxu0 %v521
    %737 = vmatprep.subr.bf16.mxu0 %v520
    %738 = vmatpush1.bf16.msra.mxu0 %v519
    %739 = vmatprep.subr.bf16.mxu0 %v518
    %740 = vmatpush1.bf16.msra.mxu0 %v517
    %741 = vmatprep.subr.bf16.mxu0 %v516
    %742 = vmatpush1.bf16.msra.mxu0 %v515
    %743 = vmatprep.subr.bf16.mxu0 %v514
    %744 = vmatpush1.bf16.msra.mxu0 %v513
    %745 = vmatprep.subr.bf16.mxu0 %v512
    %746 = vmatpush1.bf16.msra.mxu0 %v511
    %747 = vmatprep.subr.bf16.mxu0 %v542
    %748 = vmatpush2.bf16.msra.mxu0 %v541
    %749 = vmatprep.subr.bf16.mxu0 %v540
    %750 = vmatpush2.bf16.msra.mxu0 %v539
    %751 = vmatprep.subr.bf16.mxu0 %v538
    %752 = vmatpush2.bf16.msra.mxu0 %v537
    %753 = vmatprep.subr.bf16.mxu0 %v536
    %754 = vmatpush2.bf16.msra.mxu0 %v535
    %755 = vmatprep.subr.bf16.mxu0 %v534
    %756 = vmatpush2.bf16.msra.mxu0 %v533
    %757 = vmatprep.subr.bf16.mxu0 %v532
    %758 = vmatpush2.bf16.msra.mxu0 %v531
    %759 = vmatprep.subr.bf16.mxu0 %v530
    %760 = vmatpush2.bf16.msra.mxu0 %v529
    %761 = vmatprep.subr.bf16.mxu0 %v528
    %762 = vmatpush2.bf16.msra.mxu0 %v527
    %763 = vmatprep.mubr.bf16.mxu0 %v67
    %764 = vmatmul.mubr.bf16.gmra.mxu0 %v66
    %v765 = vpop.f32.mrf.mxu0
    %v766 = vadd.f32 %v725, %v765
    %v767 = vpop.f32.mrf.mxu0
    %v768 = vadd.f32 %v727, %v767
    %v769 = vpop.f32.mrf.mxu0
    %v770 = vpop.f32.mrf.mxu0
    %771 = vdwg.mxu0
    %772 = vmatprep.subr.bf16.mxu0 %v558
    %773 = vmatpush1.bf16.msra.mxu0 %v557
    %774 = vmatprep.subr.bf16.mxu0 %v556
    %775 = vmatpush1.bf16.msra.mxu0 %v555
    %776 = vmatprep.subr.bf16.mxu0 %v554
    %777 = vmatpush1.bf16.msra.mxu0 %v553
    %778 = vmatprep.subr.bf16.mxu0 %v552
    %779 = vmatpush1.bf16.msra.mxu0 %v551
    %780 = vmatprep.subr.bf16.mxu0 %v550
    %781 = vmatpush1.bf16.msra.mxu0 %v549
    %782 = vmatprep.subr.bf16.mxu0 %v548
    %783 = vmatpush1.bf16.msra.mxu0 %v547
    %784 = vmatprep.subr.bf16.mxu0 %v546
    %785 = vmatpush1.bf16.msra.mxu0 %v545
    %786 = vmatprep.subr.bf16.mxu0 %v544
    %787 = vmatpush1.bf16.msra.mxu0 %v543
    %788 = vmatprep.subr.bf16.mxu0 %v574
    %789 = vmatpush2.bf16.msra.mxu0 %v573
    %790 = vmatprep.subr.bf16.mxu0 %v572
    %791 = vmatpush2.bf16.msra.mxu0 %v571
    %792 = vmatprep.subr.bf16.mxu0 %v570
    %793 = vmatpush2.bf16.msra.mxu0 %v569
    %794 = vmatprep.subr.bf16.mxu0 %v568
    %795 = vmatpush2.bf16.msra.mxu0 %v567
    %796 = vmatprep.subr.bf16.mxu0 %v566
    %797 = vmatpush2.bf16.msra.mxu0 %v565
    %798 = vmatprep.subr.bf16.mxu0 %v564
    %799 = vmatpush2.bf16.msra.mxu0 %v563
    %800 = vmatprep.subr.bf16.mxu0 %v562
    %801 = vmatpush2.bf16.msra.mxu0 %v561
    %802 = vmatprep.subr.bf16.mxu0 %v560
    %803 = vmatpush2.bf16.msra.mxu0 %v559
    %804 = vmatprep.mubr.bf16.mxu0 %v69
    %805 = vmatmul.mubr.bf16.gmra.mxu0 %v68
    %v806 = vpop.f32.mrf.mxu0
    %v807 = vadd.f32 %v766, %v806
    %v808 = vpop.f32.mrf.mxu0
    %v809 = vadd.f32 %v768, %v808
    %v810 = vpop.f32.mrf.mxu0
    %v811 = vpop.f32.mrf.mxu0
    %812 = vdwg.mxu0
    %813 = vmatprep.subr.bf16.mxu0 0
    %814 = vmatpush1.bf16.msra.mxu0 0
    %815 = vmatprep.subr.bf16.mxu0 0
    %816 = vmatpush1.bf16.msra.mxu0 0
    %817 = vmatprep.subr.bf16.mxu0 0
    %818 = vmatpush1.bf16.msra.mxu0 0
    %819 = vmatprep.subr.bf16.mxu0 0
    %820 = vmatpush1.bf16.msra.mxu0 0
    %821 = vmatprep.subr.bf16.mxu0 0
    %822 = vmatpush1.bf16.msra.mxu0 0
    %823 = vmatprep.subr.bf16.mxu0 0
    %824 = vmatpush1.bf16.msra.mxu0 0
    %825 = vmatprep.subr.bf16.mxu0 %v688
    %826 = vmatpush1.bf16.msra.mxu0 %v685
    %827 = vmatprep.subr.bf16.mxu0 %v576
    %828 = vmatpush1.bf16.msra.mxu0 %v575
    %829 = vmatprep.subr.bf16.mxu0 0
    %830 = vmatpush2.bf16.msra.mxu0 0
    %831 = vmatprep.subr.bf16.mxu0 0
    %832 = vmatpush2.bf16.msra.mxu0 0
    %833 = vmatprep.subr.bf16.mxu0 0
    %834 = vmatpush2.bf16.msra.mxu0 0
    %835 = vmatprep.subr.bf16.mxu0 0
    %836 = vmatpush2.bf16.msra.mxu0 0
    %837 = vmatprep.subr.bf16.mxu0 0
    %838 = vmatpush2.bf16.msra.mxu0 0
    %839 = vmatprep.subr.bf16.mxu0 0
    %840 = vmatpush2.bf16.msra.mxu0 0
    %841 = vmatprep.subr.bf16.mxu0 0
    %842 = vmatpush2.bf16.msra.mxu0 0
    %843 = vmatprep.subr.bf16.mxu0 0
    %844 = vmatpush2.bf16.msra.mxu0 0
    %845 = vmatprep.mubr.bf16.mxu0 0
    %846 = vmatmul.mubr.bf16.gmra.mxu0 %v679
    %v847 = vpop.f32.mrf.mxu0
    %v848 = vadd.f32 %v807, %v847
    %v849 = vpop.f32.mrf.mxu0
    %v850 = vadd.f32 %v809, %v849
    %v851 = vpop.f32.mrf.mxu0
    %v852 = vpop.f32.mrf.mxu0
    %853 = vdwg.mxu0
    %v854 = vmul.f32 %v848, 0.2
    %v855 = vmul.f32 %v850, 0.2
    %v856 = vmax.f32 %v848, %v854
    %v857 = vmax.f32 %v850, %v855
    %v858 = vpack.c.bf16 %v856, %v856
    %v859 = vpack.c.bf16 %v857, %v857
    %v860 = vld [vmem:[#allocation5] sm:$0xff]
    %v861 = vld [vmem:[#allocation5 + $0x8] sm:$0xff]
    %v862 = vld [vmem:[#allocation5 + $0x10] sm:$0xff]
    %v863 = vld [vmem:[#allocation5 + $0x18] sm:$0xff]
    %v864 = vld [vmem:[#allocation5 + $0x20] sm:$0xff]
    %v865 = vld [vmem:[#allocation5 + $0x28] sm:$0xff]
    %v866 = vld [vmem:[#allocation5 + $0x30] sm:$0xff]
    %v867 = vld [vmem:[#allocation5 + $0x38] sm:$0xff]
    %v868 = vld [vmem:[#allocation5 + $0x40] sm:$0xff]
    %v869 = vld [vmem:[#allocation5 + $0x48] sm:$0xff]
    %v870 = vld [vmem:[#allocation5 + $0x50] sm:$0xff]
    %v871 = vld [vmem:[#allocation5 + $0x58] sm:$0xff]
    %v872 = vld [vmem:[#allocation5 + $0x60] sm:$0xff]
    %v873 = vld [vmem:[#allocation5 + $0x68] sm:$0xff]
    %v874 = vld [vmem:[#allocation5 + $0x70] sm:$0xff]
    %v875 = vld [vmem:[#allocation5 + $0x78] sm:$0xff]
    %v876 = vld [vmem:[#allocation5 + $0x80] sm:$0xff]
    %v877 = vld [vmem:[#allocation5 + $0x88] sm:$0xff]
    %v878 = vld [vmem:[#allocation5 + $0x90] sm:$0xff]
    %v879 = vld [vmem:[#allocation5 + $0x98] sm:$0xff]
    %v880 = vld [vmem:[#allocation5 + $0xa0] sm:$0xff]
    %v881 = vld [vmem:[#allocation5 + $0xa8] sm:$0xff]
    %v882 = vld [vmem:[#allocation5 + $0xb0] sm:$0xff]
    %v883 = vld [vmem:[#allocation5 + $0xb8] sm:$0xff]
    %v884 = vld [vmem:[#allocation5 + $0xc0] sm:$0xff]
    %v885 = vld [vmem:[#allocation5 + $0xc8] sm:$0xff]
    %v886 = vld [vmem:[#allocation5 + $0xd0] sm:$0xff]
    %v887 = vld [vmem:[#allocation5 + $0xd8] sm:$0xff]
    %v888 = vld [vmem:[#allocation5 + $0xe0] sm:$0xff]
    %v889 = vld [vmem:[#allocation5 + $0xe8] sm:$0xff]
    %v890 = vld [vmem:[#allocation5 + $0xf0] sm:$0xff]
    %v891 = vld [vmem:[#allocation5 + $0xf8] sm:$0xff]
    %v892 = vld [vmem:[%s4] sm:$0x3]
    %v894 = vlaneseq
    %v895 = vshrl.u32 %v894, 7
    %v896 = vsub.s32 0, %v895
    %v897 = vrot.slane %v892, %v896
    %v898 = vlaneseq
    %v899 = vshrl.u32 %v898, 7
    %v900 = vsub.s32 1, %v899
    %v901 = vrot.slane %v892, %v900
    %v936 = vunpack.c.l.b16 %v860
    %v937 = vunpack.c.h.b16 %v860
    %v938 = vunpack.c.l.b16 %v861
    %v939 = vunpack.c.h.b16 %v861
    %v940 = vunpack.c.l.b16 %v862
    %v941 = vunpack.c.h.b16 %v862
    %v942 = vunpack.c.l.b16 %v863
    %v943 = vunpack.c.h.b16 %v863
    %v944 = vunpack.c.l.b16 %v864
    %v945 = vunpack.c.h.b16 %v864
    %v946 = vunpack.c.l.b16 %v865
    %v947 = vunpack.c.h.b16 %v865
    %v948 = vunpack.c.l.b16 %v866
    %v949 = vunpack.c.h.b16 %v866
    %v950 = vunpack.c.l.b16 %v867
    %v951 = vunpack.c.h.b16 %v867
    %v952 = vunpack.c.l.b16 %v868
    %v953 = vunpack.c.h.b16 %v868
    %v954 = vunpack.c.l.b16 %v869
    %v955 = vunpack.c.h.b16 %v869
    %v956 = vunpack.c.l.b16 %v870
    %v957 = vunpack.c.h.b16 %v870
    %v958 = vunpack.c.l.b16 %v871
    %v959 = vunpack.c.h.b16 %v871
    %v960 = vunpack.c.l.b16 %v872
    %v961 = vunpack.c.h.b16 %v872
    %v962 = vunpack.c.l.b16 %v873
    %v963 = vunpack.c.h.b16 %v873
    %v964 = vunpack.c.l.b16 %v874
    %v965 = vunpack.c.h.b16 %v874
    %v966 = vunpack.c.l.b16 %v875
    %v967 = vunpack.c.h.b16 %v875
    %v968 = vunpack.c.l.b16 %v876
    %v969 = vunpack.c.h.b16 %v876
    %v970 = vunpack.c.l.b16 %v877
    %v971 = vunpack.c.h.b16 %v877
    %v972 = vunpack.c.l.b16 %v878
    %v973 = vunpack.c.h.b16 %v878
    %v974 = vunpack.c.l.b16 %v879
    %v975 = vunpack.c.h.b16 %v879
    %v976 = vunpack.c.l.b16 %v880
    %v977 = vunpack.c.h.b16 %v880
    %v978 = vunpack.c.l.b16 %v881
    %v979 = vunpack.c.h.b16 %v881
    %v980 = vunpack.c.l.b16 %v882
    %v981 = vunpack.c.h.b16 %v882
    %v982 = vunpack.c.l.b16 %v883
    %v983 = vunpack.c.h.b16 %v883
    %v984 = vunpack.c.l.b16 %v884
    %v985 = vunpack.c.h.b16 %v884
    %v986 = vunpack.c.l.b16 %v885
    %v987 = vunpack.c.h.b16 %v885
    %v988 = vunpack.c.l.b16 %v886
    %v989 = vunpack.c.h.b16 %v886
    %v990 = vunpack.c.l.b16 %v887
    %v991 = vunpack.c.h.b16 %v887
    %v992 = vunpack.c.l.b16 %v888
    %v993 = vunpack.c.h.b16 %v888
    %v994 = vunpack.c.l.b16 %v889
    %v995 = vunpack.c.h.b16 %v889
    %v996 = vunpack.c.l.b16 %v890
    %v997 = vunpack.c.h.b16 %v890
    %v998 = vunpack.c.l.b16 %v891
    %v999 = vunpack.c.h.b16 %v891
    %v1000 = vpack.c.b16 %v938, %v936
    %v1001 = vpack.c.b16 %v939, %v937
    %v1002 = vpack.c.b16 %v942, %v940
    %v1003 = vpack.c.b16 %v943, %v941
    %v1004 = vpack.c.b16 %v946, %v944
    %v1005 = vpack.c.b16 %v947, %v945
    %v1006 = vpack.c.b16 %v950, %v948
    %v1007 = vpack.c.b16 %v951, %v949
    %v1008 = vpack.c.b16 %v954, %v952
    %v1009 = vpack.c.b16 %v955, %v953
    %v1010 = vpack.c.b16 %v958, %v956
    %v1011 = vpack.c.b16 %v959, %v957
    %v1012 = vpack.c.b16 %v962, %v960
    %v1013 = vpack.c.b16 %v963, %v961
    %v1014 = vpack.c.b16 %v966, %v964
    %v1015 = vpack.c.b16 %v967, %v965
    %v1016 = vpack.c.b16 %v970, %v968
    %v1017 = vpack.c.b16 %v971, %v969
    %v1018 = vpack.c.b16 %v974, %v972
    %v1019 = vpack.c.b16 %v975, %v973
    %v1020 = vpack.c.b16 %v978, %v976
    %v1021 = vpack.c.b16 %v979, %v977
    %v1022 = vpack.c.b16 %v982, %v980
    %v1023 = vpack.c.b16 %v983, %v981
    %v1024 = vpack.c.b16 %v986, %v984
    %v1025 = vpack.c.b16 %v987, %v985
    %v1026 = vpack.c.b16 %v990, %v988
    %v1027 = vpack.c.b16 %v991, %v989
    %v1028 = vpack.c.b16 %v994, %v992
    %v1029 = vpack.c.b16 %v995, %v993
    %v1030 = vpack.c.b16 %v998, %v996
    %v1031 = vpack.c.b16 %v999, %v997
    %1064 = vmatprep.subr.bf16.mxu0 %v1015
    %1065 = vmatpush1.bf16.msra.mxu0 %v1014
    %1066 = vmatprep.subr.bf16.mxu0 %v1013
    %1067 = vmatpush1.bf16.msra.mxu0 %v1012
    %1068 = vmatprep.subr.bf16.mxu0 %v1011
    %1069 = vmatpush1.bf16.msra.mxu0 %v1010
    %1070 = vmatprep.subr.bf16.mxu0 %v1009
    %1071 = vmatpush1.bf16.msra.mxu0 %v1008
    %1072 = vmatprep.subr.bf16.mxu0 %v1007
    %1073 = vmatpush1.bf16.msra.mxu0 %v1006
    %1074 = vmatprep.subr.bf16.mxu0 %v1005
    %1075 = vmatpush1.bf16.msra.mxu0 %v1004
    %1076 = vmatprep.subr.bf16.mxu0 %v1003
    %1077 = vmatpush1.bf16.msra.mxu0 %v1002
    %1078 = vmatprep.subr.bf16.mxu0 %v1001
    %1079 = vmatpush1.bf16.msra.mxu0 %v1000
    %1080 = vmatprep.subr.bf16.mxu0 %v1031
    %1081 = vmatpush2.bf16.msra.mxu0 %v1030
    %1082 = vmatprep.subr.bf16.mxu0 %v1029
    %1083 = vmatpush2.bf16.msra.mxu0 %v1028
    %1084 = vmatprep.subr.bf16.mxu0 %v1027
    %1085 = vmatpush2.bf16.msra.mxu0 %v1026
    %1086 = vmatprep.subr.bf16.mxu0 %v1025
    %1087 = vmatpush2.bf16.msra.mxu0 %v1024
    %1088 = vmatprep.subr.bf16.mxu0 %v1023
    %1089 = vmatpush2.bf16.msra.mxu0 %v1022
    %1090 = vmatprep.subr.bf16.mxu0 %v1021
    %1091 = vmatpush2.bf16.msra.mxu0 %v1020
    %1092 = vmatprep.subr.bf16.mxu0 %v1019
    %1093 = vmatpush2.bf16.msra.mxu0 %v1018
    %1094 = vmatprep.subr.bf16.mxu0 %v1017
    %1095 = vmatpush2.bf16.msra.mxu0 %v1016
    %1096 = vmatprep.mubr.bf16.mxu0 %v859
    %1097 = vmatmul.mubr.bf16.gmra.mxu0 %v858
    %v1098 = vpop.f32.mrf.mxu0
    %v1099 = vadd.f32 %v897, %v1098
    %v1100 = vpop.f32.mrf.mxu0
    %v1101 = vadd.f32 %v901, %v1100
    %v1102 = vpop.f32.mrf.mxu0
    %v1103 = vpop.f32.mrf.mxu0
    %1104 = vdwg.mxu0
    %v1105 = vmul.f32 %v1099, 0.2
    %v1106 = vmul.f32 %v1101, 0.2
    %v1107 = vmax.f32 %v1099, %v1105
    %v1108 = vmax.f32 %v1101, %v1106
    %v1109 = vld [vmem:[%s5] sm:$0x3]
    %v1110 = vpack.c.bf16 %v1107, %v1107
    %v1111 = vpack.c.bf16 %v1108, %v1108
    %v1112 = vld [vmem:[#allocation2] sm:$0x1]
    %1114 = vset.pattern.permute.xlu0 0
    %1115 = vperm.xlu0 %1114, %v1112
    %v1116 = vpop.permute.xlu0 %1115
    %v1118 = vlaneseq
    %v1119 = vshrl.u32 %v1118, 7
    %v1120 = vsub.s32 0, %v1119
    %v1121 = vrot.slane %v1116, %v1120
    %v1124 = vunpack.c.l.s4 1966171168
    %v1125 = vunpack.c.0.s8 %v1124
    %v1126 = vlaneseq
    %v1127 = vshrl.u32 %v1126, 7
    %v1128 = vsub.s32 %v1125, %v1127
    %v1129 = vrot.slane %v1109, %v1128
    %v1130 = vcombine.high %v1129, %v1129
    %v1132 = vunpack.c.l.s4 1966171168
    %v1133 = vunpack.c.0.s8 %v1132
    %v1134 = vlaneseq
    %v1135 = vshrl.u32 %v1134, 7
    %v1136 = vsub.s32 %v1133, %v1135
    %v1137 = vrot.slane %v1129, %v1136
    %v1139 = vunpack.c.l.s4 1966171168
    %v1140 = vunpack.c.0.s8 %v1139
    %v1141 = vlaneseq
    %v1142 = vshrl.u32 %v1141, 7
    %v1143 = vsub.s32 %v1140, %v1142
    %v1144 = vrot.slane %v1130, %v1143
    %1147 = vmatprep.subr.bf16.mxu0 0
    %1148 = vmatpush1.bf16.xpose.msra.mxu0 0
    %1149 = vmatprep.subr.bf16.mxu0 0
    %1150 = vmatpush1.bf16.xpose.msra.mxu0 0
    %1151 = vmatprep.subr.bf16.mxu0 0
    %1152 = vmatpush1.bf16.xpose.msra.mxu0 0
    %1153 = vmatprep.subr.bf16.mxu0 0
    %1154 = vmatpush1.bf16.xpose.msra.mxu0 0
    %1155 = vmatprep.subr.bf16.mxu0 0
    %1156 = vmatpush1.bf16.xpose.msra.mxu0 0
    %1157 = vmatprep.subr.bf16.mxu0 0
    %1158 = vmatpush1.bf16.xpose.msra.mxu0 0
    %1159 = vmatprep.subr.bf16.mxu0 0
    %1160 = vmatpush1.bf16.xpose.msra.mxu0 0
    %1161 = vmatprep.subr.bf16.mxu0 %v1111
    %1162 = vmatpush1.bf16.xpose.msra.mxu0 %v1110
    %1163 = vmatprep.subr.bf16.mxu0 0
    %1164 = vmatpush2.bf16.xpose.msra.mxu0 0
    %1165 = vmatprep.subr.bf16.mxu0 0
    %1166 = vmatpush2.bf16.xpose.msra.mxu0 0
    %1167 = vmatprep.subr.bf16.mxu0 0
    %1168 = vmatpush2.bf16.xpose.msra.mxu0 0
    %1169 = vmatprep.subr.bf16.mxu0 0
    %1170 = vmatpush2.bf16.xpose.msra.mxu0 0
    %1171 = vmatprep.subr.bf16.mxu0 0
    %1172 = vmatpush2.bf16.xpose.msra.mxu0 0
    %1173 = vmatprep.subr.bf16.mxu0 0
    %1174 = vmatpush2.bf16.xpose.msra.mxu0 0
    %1175 = vmatprep.subr.bf16.mxu0 0
    %1176 = vmatpush2.bf16.xpose.msra.mxu0 0
    %1177 = vmatprep.subr.bf16.mxu0 0
    %1178 = vmatpush2.bf16.xpose.msra.mxu0 0
    %1179 = vmatprep.mubr.bf16.mxu0 %v1144
    %1180 = vmatmul.mubr.bf16.gmra.mxu0 %v1137
    %v1181 = vpop.f32.mrf.mxu0
    %v1182 = vadd.f32 %v1121, %v1181
    %v1183 = vpop.f32.mrf.mxu0
    %v1184 = vpop.f32.mrf.mxu0
    %v1185 = vpop.f32.mrf.mxu0
    %1186 = vdwg.mxu0
    %v1187 = vsub.f32 0.0, %v1182
    %v1188 = vmul.f32 %v1187, 1.442695
    %v1189 = vpow.pop %v1188
    %v1190 = vadd.f32 %v1189, 1.0
    %v1191 = vrcp.pop %v1190
    %vm1192 = vcmask 57344
    %1193 = vst.msk [vmem:[%s7] sm:$0x1] %vm1192, %v1191
    // Predicated region
    $region38: #{discriminator_forward.1} parent=1 // pred_check
      _
    $region39: #{discriminator_forward.1} parent=1 // pred_check_branch
      %1195 = sbr.rel (0) target = $region41
    $region40: #{discriminator_forward.1} parent=1 // pred_region
      _
    $region41: #{discriminator_forward.1} parent=1 // pred_fallthru
      _
    // Predicated region
    $region42: #{discriminator_forward.1} parent=1 // pred_check
      _
    $region43: #{discriminator_forward.1} parent=1 // pred_check_branch
      %1197 = sbr.rel (0) target = $region45
    $region44: #{discriminator_forward.1} parent=1 // pred_region
      _
    $region45: #{discriminator_forward.1} parent=1 // pred_fallthru
      _
    %1198 = vsyncpa [#allocation4], 1
    %1199 = vsyncpa [#allocation6], 1

</llo_original>
